<compile_context>
chip_gen: v5e
topology: v5e:2x2
jax: 0.10.0
libtpu: 0.0.40
codegen_flags: <defaults>
</compile_context>

<pallas_src>
import functools

import jax
import jax.numpy as jnp
from jax.experimental import pallas as pl
from jax.experimental.pallas import tpu as pltpu


def _mlp_kernel(x_ref, w1_ref, b1_ref, w2_ref, b2_ref, w3_ref, b3_ref, o_ref):
    # Three chained matmuls (MXU, f32 accumulate) + bias/ReLU in f32 (VPU).
    x = x_ref[...]
    h1 = jnp.dot(x, w1_ref[...], preferred_element_type=jnp.float32)
    h1 = jnp.maximum(h1 + b1_ref[...], 0.0)
    h2 = jnp.dot(h1.astype(w2_ref.dtype), w2_ref[...],
                 preferred_element_type=jnp.float32)
    h2 = jnp.maximum(h2 + b2_ref[...], 0.0)
    out = jnp.dot(h2.astype(w3_ref.dtype), w3_ref[...],
                  preferred_element_type=jnp.float32)
    o_ref[...] = (out + b3_ref[...]).astype(o_ref.dtype)


def _round_up(n, m):
    return ((n + m - 1) // m) * m


def _choose_block_b(B):
    """Batch tile: multiple of 8, capped at 512, and >=2 grid steps when B > 8
    so v7x's two TensorCores both get work. For large B this lands at >=128."""
    if B <= 8:
        return 8
    half = _round_up((B + 1) // 2, 8)  # ceil(B/2) rounded up to sublane multiple
    return min(512, half)


@functools.partial(jax.jit, static_argnames=("block_b", "compute_dtype"))
def mlp_forward(x, w1, b1, w2, b2, w3, b3, *, block_b=None,
                compute_dtype=jnp.bfloat16):
    B, in_sz = x.shape
    h1_sz = w1.shape[1]
    h2_sz = w2.shape[1]
    out_sz = w3.shape[1]

    if block_b is None:
        block_b = _choose_block_b(B)

    # Pad batch to a multiple of the tile so every grid step is full.
    b_pad = _round_up(B, block_b)
    if b_pad != B:
        x = jnp.pad(x, ((0, b_pad - B), (0, 0)))

    # Lane-dense output: zero-pad W3/b3 columns to a multiple of 128 and slice
    # the extra columns off after the kernel.
    out_pad = _round_up(out_sz, 128)
    if out_pad != out_sz:
        w3 = jnp.pad(w3, ((0, 0), (0, out_pad - out_sz)))
        b3 = jnp.pad(b3, ((0, 0), (0, out_pad - out_sz)))

    # bf16 operands on the MXU (full rate on v6e/v7x, f32 accumulate);
    # biases stay f32 so the post-matmul VPU math is f32 everywhere (v5e-safe).
    x = x.astype(compute_dtype)
    w1 = w1.astype(compute_dtype)
    w2 = w2.astype(compute_dtype)
    w3 = w3.astype(compute_dtype)
    b1 = b1.astype(jnp.float32)
    b2 = b2.astype(jnp.float32)
    b3 = b3.astype(jnp.float32)

    grid = (b_pad // block_b,)

    # Batch is tiled along the grid; weights/biases use a constant index_map so
    # they stay resident in VMEM across all grid steps.
    in_specs = [
        pl.BlockSpec((block_b, in_sz), lambda i: (i, 0)),    # x tile
        pl.BlockSpec((in_sz, h1_sz), lambda i: (0, 0)),      # W1
        pl.BlockSpec((1, h1_sz), lambda i: (0, 0)),          # b1
        pl.BlockSpec((h1_sz, h2_sz), lambda i: (0, 0)),      # W2
        pl.BlockSpec((1, h2_sz), lambda i: (0, 0)),          # b2
        pl.BlockSpec((h2_sz, out_pad), lambda i: (0, 0)),    # W3 (padded cols)
        pl.BlockSpec((1, out_pad), lambda i: (0, 0)),        # b3 (padded cols)
    ]
    out_specs = pl.BlockSpec((block_b, out_pad), lambda i: (i, 0))

    out_padded = pl.pallas_call(
        _mlp_kernel,
        out_shape=jax.ShapeDtypeStruct((b_pad, out_pad), jnp.float32),
        grid=grid,
        in_specs=in_specs,
        out_specs=out_specs,
        compiler_params=pltpu.CompilerParams(
            dimension_semantics=("parallel",),
            # Explicit VMEM budget: resident weights + double-buffered x/out
            # tiles are tiny here, but keep the limit inside v7x's 64 MiB.
            vmem_limit_bytes=48 * 1024 * 1024,
        ),
    )(x, w1, b1, w2, b2, w3, b3)

    return out_padded[:B, :out_sz]


def init_params(key, input_size, hidden1_size, hidden2_size, output_size):
    """Deterministic init mimicking torch.nn.Linear default (U(-1/sqrt(fan_in), +))."""
    ks = jax.random.split(key, 6)

    def linear(kw, kb, fan_in, fan_out):
        bound = 1.0 / jnp.sqrt(fan_in)
        # Stored as (in, out) so kernel does x @ W (== torch's x @ W.T).
        w = jax.random.uniform(kw, (fan_in, fan_out), jnp.float32, -bound, bound)
        b = jax.random.uniform(kb, (1, fan_out), jnp.float32, -bound, bound)
        return w, b

    w1, b1 = linear(ks[0], ks[1], input_size, hidden1_size)
    w2, b2 = linear(ks[2], ks[3], hidden1_size, hidden2_size)
    w3, b3 = linear(ks[4], ks[5], hidden2_size, output_size)
    return w1, b1, w2, b2, w3, b3


if __name__ == "__main__":
    # Shapes consistent with the module: "CDFarm_3outputs" -> output_size=3.
    # Batch large enough that the auto tile (128) gives a 2-step grid.
    batch = 256
    input_size = 16
    hidden1_size = 32
    hidden2_size = 32
    output_size = 3

    key = jax.random.PRNGKey(0)
    kx, kp = jax.random.split(key)
    x = jax.random.normal(kx, (batch, input_size), jnp.float32)
    params = init_params(kp, input_size, hidden1_size, hidden2_size, output_size)

    # Reference (same semantics as the torch forward), pure f32.
    w1, b1, w2, b2, w3, b3 = params
    ref = jnp.maximum(x @ w1 + b1, 0.0)
    ref = jnp.maximum(ref @ w2 + b2, 0.0)
    ref = ref @ w3 + b3

    # f32 compute path: tight tolerance.
    out_f32 = mlp_forward(x, *params, compute_dtype=jnp.float32)
    jax.block_until_ready(out_f32)
    assert out_f32.shape == (batch, output_size)
    assert jnp.allclose(out_f32, ref, atol=1e-5, rtol=1e-5)

    # Default bf16-operand path (f32 accumulate): looser tolerance.
    out_bf16 = mlp_forward(x, *params)
    jax.block_until_ready(out_bf16)
    assert out_bf16.shape == (batch, output_size)
    assert jnp.allclose(out_bf16, ref, atol=5e-2, rtol=5e-2)

    print("KERNEL_OK")
</pallas_src>

<mosaic_0001>
module attributes {stable_mosaic.version = 11 : i64} {
  func.func @_mlp_kernel(%arg0: i32, %arg1: memref<128x16xf32, #tpu.memory_space<vmem>>, %arg2: memref<16x32xf32, #tpu.memory_space<vmem>>, %arg3: memref<1x32xf32, #tpu.memory_space<vmem>>, %arg4: memref<32x32xf32, #tpu.memory_space<vmem>>, %arg5: memref<1x32xf32, #tpu.memory_space<vmem>>, %arg6: memref<32x128xf32, #tpu.memory_space<vmem>>, %arg7: memref<1x128xf32, #tpu.memory_space<vmem>>, %arg8: memref<128x128xf32, #tpu.memory_space<vmem>>) attributes {dimension_semantics = [#tpu.dimension_semantics<parallel>], iteration_bounds = array<i64: 2>, scalar_prefetch = 0 : i64, scratch_operands = 0 : i64, tpu.core_type = #tpu.core_type<tc>, window_params = [{transform_indices = @transform_0, window_bounds = array<i64: 128, 16>}, {pipeline_mode = #tpu.pipeline_mode<synchronous>, transform_indices = @transform_1, window_bounds = array<i64: 16, 32>}, {pipeline_mode = #tpu.pipeline_mode<synchronous>, transform_indices = @transform_2, window_bounds = array<i64: 1, 32>}, {pipeline_mode = #tpu.pipeline_mode<synchronous>, transform_indices = @transform_3, window_bounds = array<i64: 32, 32>}, {pipeline_mode = #tpu.pipeline_mode<synchronous>, transform_indices = @transform_4, window_bounds = array<i64: 1, 32>}, {pipeline_mode = #tpu.pipeline_mode<synchronous>, transform_indices = @transform_5, window_bounds = array<i64: 32, 128>}, {pipeline_mode = #tpu.pipeline_mode<synchronous>, transform_indices = @transform_6, window_bounds = array<i64: 1, 128>}, {transform_indices = @transform_7, window_bounds = array<i64: 128, 128>}]} {
    %c0 = arith.constant 0 : index
    %c0_0 = arith.constant 0 : index
    %0 = vector.load %arg1[%c0, %c0_0] : memref<128x16xf32, #tpu.memory_space<vmem>>, vector<128x16xf32>
    %c0_1 = arith.constant 0 : index
    %c0_2 = arith.constant 0 : index
    %1 = vector.load %arg2[%c0_1, %c0_2] : memref<16x32xf32, #tpu.memory_space<vmem>>, vector<16x32xf32>
    %cst = arith.constant dense<0.000000e+00> : vector<128x32xf32>
    %2 = tpu.matmul %0, %1, %cst {dimension_numbers = #tpu.dot_dimension_numbers<[1], [0], [0], [1], [0, 0, 1, 1], [], []>} : vector<128x16xf32>, vector<16x32xf32>, vector<128x32xf32> -> vector<128x32xf32>
    %c0_3 = arith.constant 0 : index
    %c0_4 = arith.constant 0 : index
    %3 = vector.load %arg3[%c0_3, %c0_4] : memref<1x32xf32, #tpu.memory_space<vmem>>, vector<1x32xf32>
    %4 = vector.broadcast %3 : vector<1x32xf32> to vector<128x32xf32>
    %5 = arith.addf %2, %4 : vector<128x32xf32>
    %cst_5 = arith.constant 0.000000e+00 : f32
    %6 = vector.broadcast %cst_5 : f32 to vector<128x32xf32>
    %7 = arith.maximumf %5, %6 : vector<128x32xf32>
    %c0_6 = arith.constant 0 : index
    %c0_7 = arith.constant 0 : index
    %8 = vector.load %arg4[%c0_6, %c0_7] : memref<32x32xf32, #tpu.memory_space<vmem>>, vector<32x32xf32>
    %cst_8 = arith.constant dense<0.000000e+00> : vector<128x32xf32>
    %9 = tpu.matmul %7, %8, %cst_8 {dimension_numbers = #tpu.dot_dimension_numbers<[1], [0], [0], [1], [0, 0, 1, 1], [], []>} : vector<128x32xf32>, vector<32x32xf32>, vector<128x32xf32> -> vector<128x32xf32>
    %c0_9 = arith.constant 0 : index
    %c0_10 = arith.constant 0 : index
    %10 = vector.load %arg5[%c0_9, %c0_10] : memref<1x32xf32, #tpu.memory_space<vmem>>, vector<1x32xf32>
    %11 = vector.broadcast %10 : vector<1x32xf32> to vector<128x32xf32>
    %12 = arith.addf %9, %11 : vector<128x32xf32>
    %cst_11 = arith.constant 0.000000e+00 : f32
    %13 = vector.broadcast %cst_11 : f32 to vector<128x32xf32>
    %14 = arith.maximumf %12, %13 : vector<128x32xf32>
    %c0_12 = arith.constant 0 : index
    %c0_13 = arith.constant 0 : index
    %15 = vector.load %arg6[%c0_12, %c0_13] : memref<32x128xf32, #tpu.memory_space<vmem>>, vector<32x128xf32>
    %cst_14 = arith.constant dense<0.000000e+00> : vector<128x128xf32>
    %16 = tpu.matmul %14, %15, %cst_14 {dimension_numbers = #tpu.dot_dimension_numbers<[1], [0], [0], [1], [0, 0, 1, 1], [], []>} : vector<128x32xf32>, vector<32x128xf32>, vector<128x128xf32> -> vector<128x128xf32>
    %c0_15 = arith.constant 0 : index
    %c0_16 = arith.constant 0 : index
    %17 = vector.load %arg7[%c0_15, %c0_16] : memref<1x128xf32, #tpu.memory_space<vmem>>, vector<1x128xf32>
    %18 = vector.broadcast %17 : vector<1x128xf32> to vector<128x128xf32>
    %19 = arith.addf %16, %18 : vector<128x128xf32>
    %c0_17 = arith.constant 0 : index
    %c0_18 = arith.constant 0 : index
    %20 = vector.load %arg8[%c0_17, %c0_18] : memref<128x128xf32, #tpu.memory_space<vmem>>, vector<128x128xf32>
    tpu.vector_store %arg8[%c0_17, %c0_18], %19 {strides = array<i32>} : memref<128x128xf32, #tpu.memory_space<vmem>>, vector<128x128xf32>,
    return
  }
  func.func @transform_0(%arg0: i32) -> (i32, i32) {
    %c0_i32 = arith.constant 0 : i32
    %c0_i32_0 = arith.constant 0 : i32
    return %arg0, %c0_i32 : i32, i32
  }
  func.func @transform_1(%arg0: i32) -> (i32, i32) {
    %c0_i32 = arith.constant 0 : i32
    %c0_i32_0 = arith.constant 0 : i32
    %c0_i32_1 = arith.constant 0 : i32
    return %c0_i32, %c0_i32_0 : i32, i32
  }
  func.func @transform_2(%arg0: i32) -> (i32, i32) {
    %c0_i32 = arith.constant 0 : i32
    %c0_i32_0 = arith.constant 0 : i32
    %c0_i32_1 = arith.constant 0 : i32
    return %c0_i32, %c0_i32_0 : i32, i32
  }
  func.func @transform_3(%arg0: i32) -> (i32, i32) {
    %c0_i32 = arith.constant 0 : i32
    %c0_i32_0 = arith.constant 0 : i32
    %c0_i32_1 = arith.constant 0 : i32
    return %c0_i32, %c0_i32_0 : i32, i32
  }
  func.func @transform_4(%arg0: i32) -> (i32, i32) {
    %c0_i32 = arith.constant 0 : i32
    %c0_i32_0 = arith.constant 0 : i32
    %c0_i32_1 = arith.constant 0 : i32
    return %c0_i32, %c0_i32_0 : i32, i32
  }
  func.func @transform_5(%arg0: i32) -> (i32, i32) {
    %c0_i32 = arith.constant 0 : i32
    %c0_i32_0 = arith.constant 0 : i32
    %c0_i32_1 = arith.constant 0 : i32
    return %c0_i32, %c0_i32_0 : i32, i32
  }
  func.func @transform_6(%arg0: i32) -> (i32, i32) {
    %c0_i32 = arith.constant 0 : i32
    %c0_i32_0 = arith.constant 0 : i32
    %c0_i32_1 = arith.constant 0 : i32
    return %c0_i32, %c0_i32_0 : i32, i32
  }
  func.func @transform_7(%arg0: i32) -> (i32, i32) {
    %c0_i32 = arith.constant 0 : i32
    %c0_i32_0 = arith.constant 0 : i32
    return %arg0, %c0_i32 : i32, i32
  }
}

</mosaic_0001>

<llo_original>
// kernel: mlp_forward.1
$region0: #{mlp_forward.1}
  #allocation0 [shape = 'u32[]', space=smem, size = 0x4, offset = 0x4, fixed_abs, tag = 'smem constant byte address 0x4 - core index']
  #allocation1 [shape = 'u32[72,128]{1,0:T(1,128)}', space=vmem, size = 0x9000, scoped, tag = 'internal scratch']
  %s0 = inlined_call_operand.vmem [shape: f32[256,16], index: 0, kind: input, shape index: {}]
  %s1 = inlined_call_operand.vmem [shape: f32[16,32], index: 1, kind: input, shape index: {}]
  %s2 = inlined_call_operand.vmem [shape: f32[1,32], index: 2, kind: input, shape index: {}]
  %s3 = inlined_call_operand.vmem [shape: f32[32,32], index: 3, kind: input, shape index: {}]
  %s4 = inlined_call_operand.vmem [shape: f32[1,32], index: 4, kind: input, shape index: {}]
  %s5 = inlined_call_operand.vmem [shape: f32[32,128], index: 5, kind: input, shape index: {}]
  %s6 = inlined_call_operand.vmem [shape: f32[1,128], index: 6, kind: input, shape index: {}]
  %s7 = inlined_call_operand.vmem [shape: f32[256,128], index: 7, kind: output, shape index: {}]
  %s8 = sld [smem:[#allocation0]]
  $region61: #{mlp_forward.1} parent=0
    _
  %s10 = ssub.s32 1, %s8
  %s11 = scalar_select 0, %s10, %s8
  loop: start=0, step=1, limit=4
  $region2: #{mlp_forward.1} parent=0 // loop_pre_header
    _
  $region3: #{mlp_forward.1} parent=0 // loop_header
    %s13 = sphi 0, %s17
    %p14 = scmp.ge.s32.totalorder %s13, 4
    %s23 = sphi 0, %s25
    %s26 = sphi 0, %s23
    %s27 = sphi 0, %s26
    %s43 = sphi 0, %s27
    %s47 = sphi 0, %s47
    %s49 = sphi 0, %s47
    %s50 = sphi 0, %s49
    %s64 = sphi 0, %s50
    %s68 = sphi 0, %s68
    %s70 = sphi 0, %s68
    %s71 = sphi 0, %s70
    %s85 = sphi 0, %s71
    %s89 = sphi 0, %s89
    %s91 = sphi 0, %s89
    %s92 = sphi 0, %s91
    %s106 = sphi 0, %s92
    %s110 = sphi 0, %s110
    %s112 = sphi 0, %s110
    %s113 = sphi 0, %s112
    %s127 = sphi 0, %s113
    %s131 = sphi 0, %s131
    %s133 = sphi 0, %s131
    %s134 = sphi 0, %s133
    %s148 = sphi 0, %s134
    %s152 = sphi 0, %s152
    %s154 = sphi 0, %s152
    %s155 = sphi 0, %s154
    %s169 = sphi 0, %s155
    %s175 = sphi 0, %s177
    %s178 = sphi 0, %s175
    %s179 = sphi 0, %s178
    %s195 = sphi 0, %s179
  $region4: #{mlp_forward.1} parent=0 // loop_header_branch
    %16 = sbr.rel (%p14) target = $region8
  $region5: #{mlp_forward.1} parent=0 // loop_body
    %s18 = ssub.s32 %s13, 1
    %s19 = ssub.s32 %s13, 2
    %s20 = sadd.s32 %s13, 1
    %s21 = ssub.s32 %s13, %s20
    %p22 = scmp.eq.s32.totalorder %s21, 0
    %s24 = sadd.s32 %s23, 1
    %s25 = scalar_select %p22, %s23, %s24
    %p28 = pneg %p22
    %p29 = scmp.eq.s32.totalorder %s13, 1
    %p30 = por %p28, %p29
    %p31 = scmp.ne.s32.totalorder %s23, %s26
    %p32 = scmp.eq.s32.totalorder %s13, 0
    %p33 = por %p31, %p32
    %p34 = scmp.ne.s32.totalorder %s23, %s26
    %p35 = scmp.eq.s32.totalorder %s18, 1
    %p36 = por %p34, %p35
    %p37 = scmp.ne.s32.totalorder %s26, %s27
    %p38 = scmp.eq.s32.totalorder %s18, 0
    %p39 = por %p37, %p38
    %p40 = scmp.ne.s32.totalorder %s26, %s27
    %p41 = scmp.eq.s32.totalorder %s19, 1
    %p42 = por %p40, %p41
    %p44 = scmp.ne.s32.totalorder %s27, %s43
    %p45 = scmp.eq.s32.totalorder %s19, 0
    %p46 = por %p44, %p45
    %s48 = sadd.s32 %s47, 1
    %p51 = scmp.eq.s32.totalorder %s13, 1
    %p52 = scmp.ne.s32.totalorder %s47, %s49
    %p53 = scmp.eq.s32.totalorder %s13, 0
    %p54 = por %p52, %p53
    %p55 = scmp.ne.s32.totalorder %s47, %s49
    %p56 = scmp.eq.s32.totalorder %s18, 1
    %p57 = por %p55, %p56
    %p58 = scmp.ne.s32.totalorder %s49, %s50
    %p59 = scmp.eq.s32.totalorder %s18, 0
    %p60 = por %p58, %p59
    %p61 = scmp.ne.s32.totalorder %s49, %s50
    %p62 = scmp.eq.s32.totalorder %s19, 1
    %p63 = por %p61, %p62
    %p65 = scmp.ne.s32.totalorder %s50, %s64
    %p66 = scmp.eq.s32.totalorder %s19, 0
    %p67 = por %p65, %p66
    %s69 = sadd.s32 %s68, 1
    %p72 = scmp.eq.s32.totalorder %s13, 1
    %p73 = scmp.ne.s32.totalorder %s68, %s70
    %p74 = scmp.eq.s32.totalorder %s13, 0
    %p75 = por %p73, %p74
    %p76 = scmp.ne.s32.totalorder %s68, %s70
    %p77 = scmp.eq.s32.totalorder %s18, 1
    %p78 = por %p76, %p77
    %p79 = scmp.ne.s32.totalorder %s70, %s71
    %p80 = scmp.eq.s32.totalorder %s18, 0
    %p81 = por %p79, %p80
    %p82 = scmp.ne.s32.totalorder %s70, %s71
    %p83 = scmp.eq.s32.totalorder %s19, 1
    %p84 = por %p82, %p83
    %p86 = scmp.ne.s32.totalorder %s71, %s85
    %p87 = scmp.eq.s32.totalorder %s19, 0
    %p88 = por %p86, %p87
    %s90 = sadd.s32 %s89, 1
    %p93 = scmp.eq.s32.totalorder %s13, 1
    %p94 = scmp.ne.s32.totalorder %s89, %s91
    %p95 = scmp.eq.s32.totalorder %s13, 0
    %p96 = por %p94, %p95
    %p97 = scmp.ne.s32.totalorder %s89, %s91
    %p98 = scmp.eq.s32.totalorder %s18, 1
    %p99 = por %p97, %p98
    %p100 = scmp.ne.s32.totalorder %s91, %s92
    %p101 = scmp.eq.s32.totalorder %s18, 0
    %p102 = por %p100, %p101
    %p103 = scmp.ne.s32.totalorder %s91, %s92
    %p104 = scmp.eq.s32.totalorder %s19, 1
    %p105 = por %p103, %p104
    %p107 = scmp.ne.s32.totalorder %s92, %s106
    %p108 = scmp.eq.s32.totalorder %s19, 0
    %p109 = por %p107, %p108
    %s111 = sadd.s32 %s110, 1
    %p114 = scmp.eq.s32.totalorder %s13, 1
    %p115 = scmp.ne.s32.totalorder %s110, %s112
    %p116 = scmp.eq.s32.totalorder %s13, 0
    %p117 = por %p115, %p116
    %p118 = scmp.ne.s32.totalorder %s110, %s112
    %p119 = scmp.eq.s32.totalorder %s18, 1
    %p120 = por %p118, %p119
    %p121 = scmp.ne.s32.totalorder %s112, %s113
    %p122 = scmp.eq.s32.totalorder %s18, 0
    %p123 = por %p121, %p122
    %p124 = scmp.ne.s32.totalorder %s112, %s113
    %p125 = scmp.eq.s32.totalorder %s19, 1
    %p126 = por %p124, %p125
    %p128 = scmp.ne.s32.totalorder %s113, %s127
    %p129 = scmp.eq.s32.totalorder %s19, 0
    %p130 = por %p128, %p129
    %s132 = sadd.s32 %s131, 1
    %p135 = scmp.eq.s32.totalorder %s13, 1
    %p136 = scmp.ne.s32.totalorder %s131, %s133
    %p137 = scmp.eq.s32.totalorder %s13, 0
    %p138 = por %p136, %p137
    %p139 = scmp.ne.s32.totalorder %s131, %s133
    %p140 = scmp.eq.s32.totalorder %s18, 1
    %p141 = por %p139, %p140
    %p142 = scmp.ne.s32.totalorder %s133, %s134
    %p143 = scmp.eq.s32.totalorder %s18, 0
    %p144 = por %p142, %p143
    %p145 = scmp.ne.s32.totalorder %s133, %s134
    %p146 = scmp.eq.s32.totalorder %s19, 1
    %p147 = por %p145, %p146
    %p149 = scmp.ne.s32.totalorder %s134, %s148
    %p150 = scmp.eq.s32.totalorder %s19, 0
    %p151 = por %p149, %p150
    %s153 = sadd.s32 %s152, 1
    %p156 = scmp.eq.s32.totalorder %s13, 1
    %p157 = scmp.ne.s32.totalorder %s152, %s154
    %p158 = scmp.eq.s32.totalorder %s13, 0
    %p159 = por %p157, %p158
    %p160 = scmp.ne.s32.totalorder %s152, %s154
    %p161 = scmp.eq.s32.totalorder %s18, 1
    %p162 = por %p160, %p161
    %p163 = scmp.ne.s32.totalorder %s154, %s155
    %p164 = scmp.eq.s32.totalorder %s18, 0
    %p165 = por %p163, %p164
    %p166 = scmp.ne.s32.totalorder %s154, %s155
    %p167 = scmp.eq.s32.totalorder %s19, 1
    %p168 = por %p166, %p167
    %p170 = scmp.ne.s32.totalorder %s155, %s169
    %p171 = scmp.eq.s32.totalorder %s19, 0
    %p172 = por %p170, %p171
    %s173 = ssub.s32 %s13, %s20
    %p174 = scmp.eq.s32.totalorder %s173, 0
    %s176 = sadd.s32 %s175, 1
    %s177 = scalar_select %p174, %s175, %s176
    %p180 = pneg %p174
    %p181 = scmp.eq.s32.totalorder %s13, 1
    %p182 = por %p180, %p181
    %p183 = scmp.ne.s32.totalorder %s175, %s178
    %p184 = scmp.eq.s32.totalorder %s13, 0
    %p185 = por %p183, %p184
    %p186 = scmp.ne.s32.totalorder %s175, %s178
    %p187 = scmp.eq.s32.totalorder %s18, 1
    %p188 = por %p186, %p187
    %p189 = scmp.ne.s32.totalorder %s178, %s179
    %p190 = scmp.eq.s32.totalorder %s18, 0
    %p191 = por %p189, %p190
    %p192 = scmp.ne.s32.totalorder %s178, %s179
    %p193 = scmp.eq.s32.totalorder %s19, 1
    %p194 = por %p192, %p193
    %p196 = scmp.ne.s32.totalorder %s179, %s195
    %p197 = scmp.eq.s32.totalorder %s19, 0
    %p198 = por %p196, %p197
    %p199 = scmp.le.s32.totalorder 1, %s13
    %p200 = scmp.lt.s32.totalorder %s13, 3
    %p201 = pnand %p199, %p200
    %p202 = pneg %p201
    // Predicated region
    $region9: #{mlp_forward.1} parent=5 // pred_check
      _
    $region10: #{mlp_forward.1} parent=5 // pred_check_branch
      %204 = sbr.rel (%p201) target = $region12
    $region11: #{mlp_forward.1} parent=5 // pred_region
      %s205 = ssub.s32 %s13, 1
      // Predicated region
      $region13: #{mlp_forward.1} parent=11 // pred_check
        %p206 = pneg %p60
      $region14: #{mlp_forward.1} parent=11 // pred_check_branch
        %208 = sbr.rel (%p206) target = $region16
      $region15: #{mlp_forward.1} parent=11 // pred_region
        _
      $region16: #{mlp_forward.1} parent=11 // pred_fallthru
        _
      // Predicated region
      $region17: #{mlp_forward.1} parent=11 // pred_check
        %p209 = pneg %p81
      $region18: #{mlp_forward.1} parent=11 // pred_check_branch
        %211 = sbr.rel (%p209) target = $region20
      $region19: #{mlp_forward.1} parent=11 // pred_region
        _
      $region20: #{mlp_forward.1} parent=11 // pred_fallthru
        _
      // Predicated region
      $region21: #{mlp_forward.1} parent=11 // pred_check
        %p212 = pneg %p102
      $region22: #{mlp_forward.1} parent=11 // pred_check_branch
        %214 = sbr.rel (%p212) target = $region24
      $region23: #{mlp_forward.1} parent=11 // pred_region
        _
      $region24: #{mlp_forward.1} parent=11 // pred_fallthru
        _
      // Predicated region
      $region25: #{mlp_forward.1} parent=11 // pred_check
        %p215 = pneg %p123
      $region26: #{mlp_forward.1} parent=11 // pred_check_branch
        %217 = sbr.rel (%p215) target = $region28
      $region27: #{mlp_forward.1} parent=11 // pred_region
        _
      $region28: #{mlp_forward.1} parent=11 // pred_fallthru
        _
      // Predicated region
      $region29: #{mlp_forward.1} parent=11 // pred_check
        %p218 = pneg %p144
      $region30: #{mlp_forward.1} parent=11 // pred_check_branch
        %220 = sbr.rel (%p218) target = $region32
      $region31: #{mlp_forward.1} parent=11 // pred_region
        _
      $region32: #{mlp_forward.1} parent=11 // pred_fallthru
        _
      // Predicated region
      $region33: #{mlp_forward.1} parent=11 // pred_check
        %p221 = pneg %p165
      $region34: #{mlp_forward.1} parent=11 // pred_check_branch
        %223 = sbr.rel (%p221) target = $region36
      $region35: #{mlp_forward.1} parent=11 // pred_region
        _
      $region36: #{mlp_forward.1} parent=11 // pred_fallthru
        _
    $region12: #{mlp_forward.1} parent=5 // pred_fallthru
      _
    %p224 = scmp.lt.s32.totalorder %s13, 2
    // Predicated region
    $region37: #{mlp_forward.1} parent=5 // pred_check
      %p225 = pneg %p224
    $region38: #{mlp_forward.1} parent=5 // pred_check_branch
      %227 = sbr.rel (%p225) target = $region40
    $region39: #{mlp_forward.1} parent=5 // pred_region
      // Predicated region
      $region41: #{mlp_forward.1} parent=39 // pred_check
        %p228 = pneg %p33
      $region42: #{mlp_forward.1} parent=39 // pred_check_branch
        %230 = sbr.rel (%p228) target = $region44
      $region43: #{mlp_forward.1} parent=39 // pred_region
        %s231 = smul.u32 16, %s13
        %p232 = scmp.lt.s32.totalorder %s231, 31
        %s233 = scalar_select %p232, %s231, 31
        %s234 = smul.addr %s233, 8
        %s235 = scalar_lea.vmem %s0, %s234
        %s236 = smul.u32 16, %s13
      $region44: #{mlp_forward.1} parent=39 // pred_fallthru
        _
    $region40: #{mlp_forward.1} parent=5 // pred_fallthru
      _
    %p237 = scmp.le.s32.totalorder 1, %s13
    %p238 = scmp.lt.s32.totalorder %s13, 3
    %p239 = pnand %p237, %p238
    %p240 = pneg %p239
    // Predicated region
    $region45: #{mlp_forward.1} parent=5 // pred_check
      _
    $region46: #{mlp_forward.1} parent=5 // pred_check_branch
      %242 = sbr.rel (%p239) target = $region48
    $region47: #{mlp_forward.1} parent=5 // pred_region
      %s243 = ssub.s32 %s13, 1
      %s244 = smul.u32 16, %s18
      %p245 = scmp.lt.s32.totalorder %s244, 31
      %s246 = scalar_select %p245, %s244, 31
      %s247 = smul.addr %s246, 8
      %s248 = scalar_lea.vmem %s0, %s247
      %p249 = pneg %p39
      %p250 = pneg %p36
      %p251 = pneg %p60
      %p252 = pneg %p57
      %p253 = pneg %p81
      %p254 = pneg %p78
      %p255 = pneg %p102
      %p256 = pneg %p99
      %p257 = pneg %p123
      %p258 = pneg %p120
      %p259 = pneg %p144
      %p260 = pneg %p141
      %p261 = pneg %p165
      %p262 = pneg %p162
      %p263 = pneg %p191
      %p264 = pneg %p188
      %s265 = smul.u32 16, %s18
      %p266 = scmp.lt.s32.totalorder %s265, 31
      %s267 = scalar_select %p266, %s265, 31
      %s268 = smul.addr %s267, 8
      %s269 = scalar_lea.vmem %s7, %s268
      %s270 = smul.u32 16, %s18
      %p271 = scmp.lt.s32.totalorder %s270, 31
      %s272 = scalar_select %p271, %s270, 31
      %s273 = smul.addr %s272, 8
      %s274 = scalar_lea.vmem %s0, %s273
      %s275 = smul.u32 16, %s18
      %s276 = smul.u32 16, %s18
      %p277 = scmp.lt.s32.totalorder %s276, 31
      %s278 = scalar_select %p277, %s276, 31
      %s279 = smul.addr %s278, 8
      %s280 = scalar_lea.vmem %s7, %s279
      %s281 = smul.u32 16, %s18
      %v282 = vld [vmem:[%s274] sm:$0xff]
      %v283 = vld [vmem:[%s274 + $0x8] sm:$0xff]
      %v284 = vld [vmem:[%s274 + $0x10] sm:$0xff]
      %v285 = vld [vmem:[%s274 + $0x18] sm:$0xff]
      %v286 = vld [vmem:[%s274 + $0x20] sm:$0xff]
      %v287 = vld [vmem:[%s274 + $0x28] sm:$0xff]
      %v288 = vld [vmem:[%s274 + $0x30] sm:$0xff]
      %v289 = vld [vmem:[%s274 + $0x38] sm:$0xff]
      %v290 = vld [vmem:[%s274 + $0x40] sm:$0xff]
      %v291 = vld [vmem:[%s274 + $0x48] sm:$0xff]
      %v292 = vld [vmem:[%s274 + $0x50] sm:$0xff]
      %v293 = vld [vmem:[%s274 + $0x58] sm:$0xff]
      %v294 = vld [vmem:[%s274 + $0x60] sm:$0xff]
      %v295 = vld [vmem:[%s274 + $0x68] sm:$0xff]
      %v296 = vld [vmem:[%s274 + $0x70] sm:$0xff]
      %v297 = vld [vmem:[%s274 + $0x78] sm:$0xff]
      %v298 = vld [vmem:[%s1] sm:$0xff]
      %v299 = vld [vmem:[%s1 + $0x8] sm:$0xff]
      %v300 = vld [vmem:[%s2] sm:$0x1]
      %v302 = vperm.slane %v300, 0
      %vm304 = vcmask 130048
      %v306 = vsel %vm304, %v282, 0
      %v309 = vsel %vm304, %v283, 0
      %v312 = vsel %vm304, %v284, 0
      %v315 = vsel %vm304, %v285, 0
      %v318 = vsel %vm304, %v286, 0
      %v321 = vsel %vm304, %v287, 0
      %v324 = vsel %vm304, %v288, 0
      %v327 = vsel %vm304, %v289, 0
      %v330 = vsel %vm304, %v290, 0
      %v333 = vsel %vm304, %v291, 0
      %v336 = vsel %vm304, %v292, 0
      %v339 = vsel %vm304, %v293, 0
      %v342 = vsel %vm304, %v294, 0
      %v345 = vsel %vm304, %v295, 0
      %v348 = vsel %vm304, %v296, 0
      %v351 = vsel %vm304, %v297, 0
      %353 = vmatpush.msra.mxu0 0.0
      %354 = vmatpush.msra.mxu0 0.0
      %355 = vmatpush.msra.mxu0 0.0
      %356 = vmatpush.msra.mxu0 0.0
      %357 = vmatpush.msra.mxu0 0.0
      %358 = vmatpush.msra.mxu0 0.0
      %359 = vmatpush.msra.mxu0 0.0
      %360 = vmatpush.msra.mxu0 0.0
      %361 = vmatpush.msra.mxu0 0.0
      %362 = vmatpush.msra.mxu0 0.0
      %363 = vmatpush.msra.mxu0 0.0
      %364 = vmatpush.msra.mxu0 0.0
      %365 = vmatpush.msra.mxu0 0.0
      %366 = vmatpush.msra.mxu0 0.0
      %367 = vmatpush.msra.mxu0 %v299
      %368 = vmatpush.msra.mxu0 %v298
      %369 = vmatmul.f32.gmra.mxu0 %v306
      %v370 = vpop.f32.mrf.mxu0
      %v371 = vadd.f32 %v302, %v370
      %372 = vmatmul.f32.gmra.mxu0 %v309
      %v373 = vpop.f32.mrf.mxu0
      %v374 = vadd.f32 %v302, %v373
      %375 = vmatmul.f32.gmra.mxu0 %v312
      %v376 = vpop.f32.mrf.mxu0
      %v377 = vadd.f32 %v302, %v376
      %378 = vmatmul.f32.gmra.mxu0 %v315
      %v379 = vpop.f32.mrf.mxu0
      %v380 = vadd.f32 %v302, %v379
      %381 = vmatmul.f32.gmra.mxu0 %v318
      %v382 = vpop.f32.mrf.mxu0
      %v383 = vadd.f32 %v302, %v382
      %384 = vmatmul.f32.gmra.mxu0 %v321
      %v385 = vpop.f32.mrf.mxu0
      %v386 = vadd.f32 %v302, %v385
      %387 = vmatmul.f32.gmra.mxu0 %v324
      %v388 = vpop.f32.mrf.mxu0
      %v389 = vadd.f32 %v302, %v388
      %390 = vmatmul.f32.gmra.mxu0 %v327
      %v391 = vpop.f32.mrf.mxu0
      %v392 = vadd.f32 %v302, %v391
      %393 = vmatmul.f32.gmra.mxu0 %v330
      %v394 = vpop.f32.mrf.mxu0
      %v395 = vadd.f32 %v302, %v394
      %396 = vmatmul.f32.gmra.mxu0 %v333
      %v397 = vpop.f32.mrf.mxu0
      %v398 = vadd.f32 %v302, %v397
      %399 = vmatmul.f32.gmra.mxu0 %v336
      %v400 = vpop.f32.mrf.mxu0
      %v401 = vadd.f32 %v302, %v400
      %402 = vmatmul.f32.gmra.mxu0 %v339
      %v403 = vpop.f32.mrf.mxu0
      %v404 = vadd.f32 %v302, %v403
      %405 = vmatmul.f32.gmra.mxu0 %v342
      %v406 = vpop.f32.mrf.mxu0
      %v407 = vadd.f32 %v302, %v406
      %408 = vmatmul.f32.gmra.mxu0 %v345
      %v409 = vpop.f32.mrf.mxu0
      %v410 = vadd.f32 %v302, %v409
      %411 = vmatmul.f32.gmra.mxu0 %v348
      %v412 = vpop.f32.mrf.mxu0
      %v413 = vadd.f32 %v302, %v412
      %414 = vmatmul.f32.gmra.mxu0 %v351
      %v415 = vpop.f32.mrf.mxu0
      %v416 = vadd.f32 %v302, %v415
      %417 = vdwg.mxu0
      %v418 = vmax.f32 %v371, 0.0
      %v419 = vmax.f32 %v374, 0.0
      %v420 = vmax.f32 %v377, 0.0
      %v421 = vmax.f32 %v380, 0.0
      %v422 = vmax.f32 %v383, 0.0
      %v423 = vmax.f32 %v386, 0.0
      %v424 = vmax.f32 %v389, 0.0
      %v425 = vmax.f32 %v392, 0.0
      %v426 = vmax.f32 %v395, 0.0
      %v427 = vmax.f32 %v398, 0.0
      %v428 = vmax.f32 %v401, 0.0
      %v429 = vmax.f32 %v404, 0.0
      %v430 = vmax.f32 %v407, 0.0
      %v431 = vmax.f32 %v410, 0.0
      %v432 = vmax.f32 %v413, 0.0
      %v433 = vmax.f32 %v416, 0.0
      %v434 = vld [vmem:[%s3] sm:$0xff]
      %v435 = vld [vmem:[%s3 + $0x8] sm:$0xff]
      %v436 = vld [vmem:[%s3 + $0x10] sm:$0xff]
      %v437 = vld [vmem:[%s3 + $0x18] sm:$0xff]
      %v438 = vld [vmem:[%s4] sm:$0x1]
      %v440 = vperm.slane %v438, 0
      %vm442 = vcmask 261120
      %v444 = vsel %vm442, %v418, 0
      %v447 = vsel %vm442, %v419, 0
      %v450 = vsel %vm442, %v420, 0
      %v453 = vsel %vm442, %v421, 0
      %v456 = vsel %vm442, %v422, 0
      %v459 = vsel %vm442, %v423, 0
      %v462 = vsel %vm442, %v424, 0
      %v465 = vsel %vm442, %v425, 0
      %v468 = vsel %vm442, %v426, 0
      %v471 = vsel %vm442, %v427, 0
      %v474 = vsel %vm442, %v428, 0
      %v477 = vsel %vm442, %v429, 0
      %v480 = vsel %vm442, %v430, 0
      %v483 = vsel %vm442, %v431, 0
      %v486 = vsel %vm442, %v432, 0
      %v489 = vsel %vm442, %v433, 0
      %491 = vmatpush.msra.mxu0 0.0
      %492 = vmatpush.msra.mxu0 0.0
      %493 = vmatpush.msra.mxu0 0.0
      %494 = vmatpush.msra.mxu0 0.0
      %495 = vmatpush.msra.mxu0 0.0
      %496 = vmatpush.msra.mxu0 0.0
      %497 = vmatpush.msra.mxu0 0.0
      %498 = vmatpush.msra.mxu0 0.0
      %499 = vmatpush.msra.mxu0 0.0
      %500 = vmatpush.msra.mxu0 0.0
      %501 = vmatpush.msra.mxu0 0.0
      %502 = vmatpush.msra.mxu0 0.0
      %503 = vmatpush.msra.mxu0 %v437
      %504 = vmatpush.msra.mxu0 %v436
      %505 = vmatpush.msra.mxu0 %v435
      %506 = vmatpush.msra.mxu0 %v434
      %507 = vmatmul.f32.gmra.mxu0 %v444
      %v508 = vpop.f32.mrf.mxu0
      %v509 = vadd.f32 %v440, %v508
      %510 = vmatmul.f32.gmra.mxu0 %v447
      %v511 = vpop.f32.mrf.mxu0
      %v512 = vadd.f32 %v440, %v511
      %513 = vmatmul.f32.gmra.mxu0 %v450
      %v514 = vpop.f32.mrf.mxu0
      %v515 = vadd.f32 %v440, %v514
      %516 = vmatmul.f32.gmra.mxu0 %v453
      %v517 = vpop.f32.mrf.mxu0
      %v518 = vadd.f32 %v440, %v517
      %519 = vmatmul.f32.gmra.mxu0 %v456
      %v520 = vpop.f32.mrf.mxu0
      %v521 = vadd.f32 %v440, %v520
      %522 = vmatmul.f32.gmra.mxu0 %v459
      %v523 = vpop.f32.mrf.mxu0
      %v524 = vadd.f32 %v440, %v523
      %525 = vmatmul.f32.gmra.mxu0 %v462
      %v526 = vpop.f32.mrf.mxu0
      %v527 = vadd.f32 %v440, %v526
      %528 = vmatmul.f32.gmra.mxu0 %v465
      %v529 = vpop.f32.mrf.mxu0
      %v530 = vadd.f32 %v440, %v529
      %531 = vmatmul.f32.gmra.mxu0 %v468
      %v532 = vpop.f32.mrf.mxu0
      %v533 = vadd.f32 %v440, %v532
      %534 = vmatmul.f32.gmra.mxu0 %v471
      %v535 = vpop.f32.mrf.mxu0
      %v536 = vadd.f32 %v440, %v535
      %537 = vmatmul.f32.gmra.mxu0 %v474
      %v538 = vpop.f32.mrf.mxu0
      %v539 = vadd.f32 %v440, %v538
      %540 = vmatmul.f32.gmra.mxu0 %v477
      %v541 = vpop.f32.mrf.mxu0
      %v542 = vadd.f32 %v440, %v541
      %543 = vmatmul.f32.gmra.mxu0 %v480
      %v544 = vpop.f32.mrf.mxu0
      %v545 = vadd.f32 %v440, %v544
      %546 = vmatmul.f32.gmra.mxu0 %v483
      %v547 = vpop.f32.mrf.mxu0
      %v548 = vadd.f32 %v440, %v547
      %549 = vmatmul.f32.gmra.mxu0 %v486
      %v550 = vpop.f32.mrf.mxu0
      %v551 = vadd.f32 %v440, %v550
      %552 = vmatmul.f32.gmra.mxu0 %v489
      %v553 = vpop.f32.mrf.mxu0
      %v554 = vadd.f32 %v440, %v553
      %555 = vdwg.mxu0
      %v556 = vmax.f32 %v509, 0.0
      %v557 = vmax.f32 %v512, 0.0
      %v558 = vmax.f32 %v515, 0.0
      %v559 = vmax.f32 %v518, 0.0
      %v560 = vmax.f32 %v521, 0.0
      %v561 = vmax.f32 %v524, 0.0
      %v562 = vmax.f32 %v527, 0.0
      %v563 = vmax.f32 %v530, 0.0
      %v564 = vmax.f32 %v533, 0.0
      %v565 = vmax.f32 %v536, 0.0
      %v566 = vmax.f32 %v539, 0.0
      %v567 = vmax.f32 %v542, 0.0
      %v568 = vmax.f32 %v545, 0.0
      %v569 = vmax.f32 %v548, 0.0
      %v570 = vmax.f32 %v551, 0.0
      %v571 = vmax.f32 %v554, 0.0
      %v572 = vld [vmem:[%s5] sm:$0xff]
      %v573 = vld [vmem:[%s5 + $0x8] sm:$0xff]
      %v574 = vld [vmem:[%s5 + $0x10] sm:$0xff]
      %v575 = vld [vmem:[%s5 + $0x18] sm:$0xff]
      %v576 = vld [vmem:[%s6] sm:$0x1]
      %v578 = vperm.slane %v576, 0
      %v581 = vsel %vm442, %v556, 0
      %v584 = vsel %vm442, %v557, 0
      %v587 = vsel %vm442, %v558, 0
      %v590 = vsel %vm442, %v559, 0
      %v593 = vsel %vm442, %v560, 0
      %v596 = vsel %vm442, %v561, 0
      %v599 = vsel %vm442, %v562, 0
      %v602 = vsel %vm442, %v563, 0
      %v605 = vsel %vm442, %v564, 0
      %v608 = vsel %vm442, %v565, 0
      %v611 = vsel %vm442, %v566, 0
      %v614 = vsel %vm442, %v567, 0
      %v617 = vsel %vm442, %v568, 0
      %v620 = vsel %vm442, %v569, 0
      %v623 = vsel %vm442, %v570, 0
      %v626 = vsel %vm442, %v571, 0
      %628 = vmatpush.msra.mxu0 0.0
      %629 = vmatpush.msra.mxu0 0.0
      %630 = vmatpush.msra.mxu0 0.0
      %631 = vmatpush.msra.mxu0 0.0
      %632 = vmatpush.msra.mxu0 0.0
      %633 = vmatpush.msra.mxu0 0.0
      %634 = vmatpush.msra.mxu0 0.0
      %635 = vmatpush.msra.mxu0 0.0
      %636 = vmatpush.msra.mxu0 0.0
      %637 = vmatpush.msra.mxu0 0.0
      %638 = vmatpush.msra.mxu0 0.0
      %639 = vmatpush.msra.mxu0 0.0
      %640 = vmatpush.msra.mxu0 %v575
      %641 = vmatpush.msra.mxu0 %v574
      %642 = vmatpush.msra.mxu0 %v573
      %643 = vmatpush.msra.mxu0 %v572
      %644 = vmatmul.f32.gmra.mxu0 %v581
      %v645 = vpop.f32.mrf.mxu0
      %v646 = vadd.f32 %v578, %v645
      %647 = vmatmul.f32.gmra.mxu0 %v584
      %v648 = vpop.f32.mrf.mxu0
      %v649 = vadd.f32 %v578, %v648
      %650 = vmatmul.f32.gmra.mxu0 %v587
      %v651 = vpop.f32.mrf.mxu0
      %v652 = vadd.f32 %v578, %v651
      %653 = vmatmul.f32.gmra.mxu0 %v590
      %v654 = vpop.f32.mrf.mxu0
      %v655 = vadd.f32 %v578, %v654
      %656 = vmatmul.f32.gmra.mxu0 %v593
      %v657 = vpop.f32.mrf.mxu0
      %v658 = vadd.f32 %v578, %v657
      %659 = vmatmul.f32.gmra.mxu0 %v596
      %v660 = vpop.f32.mrf.mxu0
      %v661 = vadd.f32 %v578, %v660
      %662 = vmatmul.f32.gmra.mxu0 %v599
      %v663 = vpop.f32.mrf.mxu0
      %v664 = vadd.f32 %v578, %v663
      %665 = vmatmul.f32.gmra.mxu0 %v602
      %v666 = vpop.f32.mrf.mxu0
      %v667 = vadd.f32 %v578, %v666
      %668 = vmatmul.f32.gmra.mxu0 %v605
      %v669 = vpop.f32.mrf.mxu0
      %v670 = vadd.f32 %v578, %v669
      %671 = vmatmul.f32.gmra.mxu0 %v608
      %v672 = vpop.f32.mrf.mxu0
      %v673 = vadd.f32 %v578, %v672
      %674 = vmatmul.f32.gmra.mxu0 %v611
      %v675 = vpop.f32.mrf.mxu0
      %v676 = vadd.f32 %v578, %v675
      %677 = vmatmul.f32.gmra.mxu0 %v614
      %v678 = vpop.f32.mrf.mxu0
      %v679 = vadd.f32 %v578, %v678
      %680 = vmatmul.f32.gmra.mxu0 %v617
      %v681 = vpop.f32.mrf.mxu0
      %v682 = vadd.f32 %v578, %v681
      %683 = vmatmul.f32.gmra.mxu0 %v620
      %v684 = vpop.f32.mrf.mxu0
      %v685 = vadd.f32 %v578, %v684
      %686 = vmatmul.f32.gmra.mxu0 %v623
      %v687 = vpop.f32.mrf.mxu0
      %v688 = vadd.f32 %v578, %v687
      %689 = vmatmul.f32.gmra.mxu0 %v626
      %v690 = vpop.f32.mrf.mxu0
      %v691 = vadd.f32 %v578, %v690
      %692 = vdwg.mxu0
      %693 = vst [vmem:[%s280] sm:$0xff] %v646
      %694 = vst [vmem:[%s280 + $0x8] sm:$0xff] %v649
      %695 = vst [vmem:[%s280 + $0x10] sm:$0xff] %v652
      %696 = vst [vmem:[%s280 + $0x18] sm:$0xff] %v655
      %697 = vst [vmem:[%s280 + $0x20] sm:$0xff] %v658
      %698 = vst [vmem:[%s280 + $0x28] sm:$0xff] %v661
      %699 = vst [vmem:[%s280 + $0x30] sm:$0xff] %v664
      %700 = vst [vmem:[%s280 + $0x38] sm:$0xff] %v667
      %701 = vst [vmem:[%s280 + $0x40] sm:$0xff] %v670
      %702 = vst [vmem:[%s280 + $0x48] sm:$0xff] %v673
      %703 = vst [vmem:[%s280 + $0x50] sm:$0xff] %v676
      %704 = vst [vmem:[%s280 + $0x58] sm:$0xff] %v679
      %705 = vst [vmem:[%s280 + $0x60] sm:$0xff] %v682
      %706 = vst [vmem:[%s280 + $0x68] sm:$0xff] %v685
      %707 = vst [vmem:[%s280 + $0x70] sm:$0xff] %v688
      %708 = vst [vmem:[%s280 + $0x78] sm:$0xff] %v691
      %s709 = smul.u32 16, %s18
      %p710 = scmp.lt.s32.totalorder %s709, 31
      %s711 = scalar_select %p710, %s709, 31
      %s712 = smul.addr %s711, 8
      %s713 = scalar_lea.vmem %s7, %s712
      // Predicated region
      $region49: #{mlp_forward.1} parent=47 // pred_check
        %p714 = pneg %p188
      $region50: #{mlp_forward.1} parent=47 // pred_check_branch
        %716 = sbr.rel (%p714) target = $region52
      $region51: #{mlp_forward.1} parent=47 // pred_region
        %s717 = smul.u32 16, %s18
      $region52: #{mlp_forward.1} parent=47 // pred_fallthru
        _
    $region48: #{mlp_forward.1} parent=5 // pred_fallthru
      _
    %p718 = scmp.le.s32.totalorder 2, %s13
    // Predicated region
    $region53: #{mlp_forward.1} parent=5 // pred_check
      %p719 = pneg %p718
    $region54: #{mlp_forward.1} parent=5 // pred_check_branch
      %721 = sbr.rel (%p719) target = $region56
    $region55: #{mlp_forward.1} parent=5 // pred_region
      %s722 = ssub.s32 %s13, 2
      // Predicated region
      $region57: #{mlp_forward.1} parent=55 // pred_check
        %p723 = pneg %p194
      $region58: #{mlp_forward.1} parent=55 // pred_check_branch
        %725 = sbr.rel (%p723) target = $region60
      $region59: #{mlp_forward.1} parent=55 // pred_region
        %s726 = smul.u32 16, %s19
        %p727 = scmp.lt.s32.totalorder %s726, 31
        %s728 = scalar_select %p727, %s726, 31
        %s729 = smul.addr %s728, 8
        %s730 = scalar_lea.vmem %s7, %s729
      $region60: #{mlp_forward.1} parent=55 // pred_fallthru
        _
    $region56: #{mlp_forward.1} parent=5 // pred_fallthru
      _
  $region6: #{mlp_forward.1} parent=0 // loop_footer
    %s17 = sadd.s32 1, %s13
  $region7: #{mlp_forward.1} parent=0 // loop_footer_branch
    %12 = sbr.rel target = $region3
  $region8: #{mlp_forward.1} parent=0 // loop_exit
    _

</llo_original>
